<compile_context>
chip_gen: v7x
topology: tpu7x:2x2x1
jax: 0.10.0
libtpu: 0.0.40
codegen_flags: <defaults>
</compile_context>

<pallas_src>
import math

import jax
import jax.numpy as jnp
from jax.experimental import pallas as pl
from jax.experimental.pallas import tpu as pltpu

_FILL_VALUE = 1e-06
_PALLAS_MIN_ELEMENTS = 1 << 20  # below this, a standalone mem-bound kernel can't win


def _masking_kernel(x_ref, mask_ref, o_ref):
    # x_ref: (TB, L) in x.dtype, mask_ref: (1, L) in x.dtype (nonzero = masked).
    fill = jnp.asarray(_FILL_VALUE, dtype=o_ref.dtype)
    o_ref[...] = jnp.where(mask_ref[...] != 0, fill, x_ref[...])


def _pick_row_tile(num_rows, lane_width, itemsize):
    """Rows per tile: ~4 MiB tiles, rounded to the dtype's sublane packing."""
    mult = 8 * max(1, 4 // itemsize)           # f32: 8, bf16: 16, int8/fp8: 32
    target_tile_bytes = 4 << 20                # portable across v5e / v6e / v7x
    tb = max(mult, (target_tile_bytes // (lane_width * itemsize)) // mult * mult)
    # Guarantee >= 2 grid steps for big-enough inputs so both v7x TCs stream.
    if num_rows > mult and num_rows * lane_width * itemsize >= (1 << 20):
        half = -(-((num_rows + 1) // 2) // mult) * mult
        tb = min(tb, half)
    if num_rows <= tb:
        return num_rows                        # single full-extent block (always legal)
    return tb                                  # multiple of `mult`; edge block handled by cdiv grid


def _vmem_limit_bytes(tile_rows, lane_width, itemsize):
    """Explicit scoped-VMEM budget: double-buffered (in + out) tiles + mask + slack."""
    tile = tile_rows * lane_width * itemsize
    mask = lane_width * itemsize
    need = 2 * (2 * tile) + 2 * mask           # 2 pipeline buffers each for x-in and out
    need = int(need * 1.25) + (1 << 20)        # 25% slack + 1 MiB compiler scratch
    return max(4 << 20, min(need, 48 << 20))   # never above a v7x-safe 48 MiB


def _masked_fill_pallas(x2, mask2):
    """x2: (R, L) with L % 128 == 0, mask2: (1, L) in x2.dtype. Returns filled (R, L)."""
    R, L = x2.shape
    itemsize = x2.dtype.itemsize
    TB = _pick_row_tile(R, L, itemsize)
    grid = (pl.cdiv(R, TB),)

    return pl.pallas_call(
        _masking_kernel,
        out_shape=jax.ShapeDtypeStruct((R, L), x2.dtype),
        grid_spec=pltpu.PrefetchScalarGridSpec(
            num_scalar_prefetch=0,
            grid=grid,
            in_specs=[
                pl.BlockSpec((TB, L), lambda i: (i, 0)),
                pl.BlockSpec((1, L), lambda i: (0, 0)),   # mask stays VMEM-resident
            ],
            out_specs=pl.BlockSpec((TB, L), lambda i: (i, 0)),
        ),
        compiler_params=pltpu.CompilerParams(
            dimension_semantics=("parallel",),             # v7x: shard rows over 2 TCs
            vmem_limit_bytes=_vmem_limit_bytes(TB, L, itemsize),
        ),
        cost_estimate=pl.CostEstimate(
            flops=0,
            transcendentals=0,
            bytes_accessed=2 * R * L * itemsize + L * itemsize,
        ),
    )(x2, mask2)


def create_fixed_random_mask(num_features, key):
    """Deterministic analogue of the torch.randperm-based 10% mask."""
    num_masked = int(num_features * 0.1)
    perm = jax.random.permutation(key, num_features)
    masked_indices = perm[:num_masked]
    mask = jnp.zeros((num_features,), dtype=bool)
    mask = mask.at[masked_indices].set(True)
    return mask


class FixedMaskingModule:
    """JAX/Pallas port of the PyTorch FixedMaskingModule forward pass."""

    def __init__(self, num_features, key):
        self.num_features = num_features
        self.mask = create_fixed_random_mask(num_features, key)   # (F,) bool, fixed
        self._L = math.lcm(num_features, 128)                     # lane-dense width
        self._reps = self._L // num_features
        self._mask_cache = {}                                      # dtype name -> (1, L)

    def _tiled_mask(self, dtype):
        """Fixed mask, pre-tiled to width L and pre-cast to x.dtype (cached)."""
        dt = jnp.dtype(dtype)
        m = self._mask_cache.get(dt.name)
        if m is None:
            m = jnp.tile(self.mask.astype(dt), self._reps).reshape(1, self._L)
            self._mask_cache[dt.name] = m
        return m

    def __call__(self, x, use_pallas=None):
        if x is None:
            raise ValueError("Input tensor x is None.")
        if x.ndim != 2:
            # TODO(synk): only the 2D (batch, features) layout of the original module is handled.
            raise ValueError("Expected a 2D (batch, features) input.")
        if x.shape[1] != self.num_features:
            raise ValueError(
                "Mask size does not match the number of features in the input tensor."
            )

        B, F = x.shape
        if use_pallas is None:
            use_pallas = B * F >= _PALLAS_MIN_ELEMENTS
        if not use_pallas:
            # Tiny / fusion-friendly path: fused XLA select beats any kernel launch.
            return jnp.where(self.mask[None, :], jnp.asarray(_FILL_VALUE, x.dtype), x)

        L, reps = self._L, self._reps
        mask2 = self._tiled_mask(x.dtype)

        # Lane-dense layout: view (B, F) as (R, L) with L = lcm(F, 128). If B is
        # not a multiple of reps = L // F, pad rows (values irrelevant; sliced off
        # below) so the Pallas path never emits lane-sparse masked stores.
        b_pad = -(-B // reps) * reps
        if b_pad != B:
            x = jnp.pad(x, ((0, b_pad - B), (0, 0)))
        R = (b_pad * F) // L
        out2 = _masked_fill_pallas(x.reshape(R, L), mask2)
        out = out2.reshape(b_pad, F)
        return out if b_pad == B else out[:B]


if __name__ == "__main__":
    key = jax.random.PRNGKey(0)
    k_mask, k_x = jax.random.split(key)

    # Case 1: module-like small shape (batch=8, num_features=32), forced Pallas.
    # F=32 -> lane-dense (2, 128) view inside the wrapper.
    B, F = 8, 32
    mod = FixedMaskingModule(F, k_mask)
    x = jax.random.normal(k_x, (B, F), dtype=jnp.float32)
    y = jax.block_until_ready(mod(x, use_pallas=True))
    y_ref = jnp.where(mod.mask[None, :], jnp.float32(_FILL_VALUE), x)
    assert jnp.array_equal(y, y_ref), "case 1 mismatch vs reference"

    # Case 2: multi-step grid + parallel row axis (F multiple of 128, L == F).
    B2, F2 = 2048, 256
    k_mask2, k_x2 = jax.random.split(k_x)
    mod2 = FixedMaskingModule(F2, k_mask2)
    x2 = jax.random.normal(k_x2, (B2, F2), dtype=jnp.float32)
    y2 = jax.block_until_ready(mod2(x2, use_pallas=True))
    assert jnp.array_equal(
        y2, jnp.where(mod2.mask[None, :], jnp.float32(_FILL_VALUE), x2)
    ), "case 2 mismatch vs reference"

    # Case 3: awkward shape (B not a multiple of reps) -> padded lane-dense path.
    B3, F3 = 5, 48
    k_mask3, k_x3 = jax.random.split(k_x2)
    mod3 = FixedMaskingModule(F3, k_mask3)
    x3 = jax.random.normal(k_x3, (B3, F3), dtype=jnp.float32)
    y3 = jax.block_until_ready(mod3(x3, use_pallas=True))
    assert jnp.array_equal(
        y3, jnp.where(mod3.mask[None, :], jnp.float32(_FILL_VALUE), x3)
    ), "case 3 mismatch vs reference"

    # Case 4: bf16 input -> mask cached in bf16, sublane multiple 16.
    B4, F4 = 128, 192
    k_mask4, k_x4 = jax.random.split(k_x3)
    mod4 = FixedMaskingModule(F4, k_mask4)
    x4 = jax.random.normal(k_x4, (B4, F4), dtype=jnp.bfloat16)
    y4 = jax.block_until_ready(mod4(x4, use_pallas=True))
    assert jnp.array_equal(
        y4, jnp.where(mod4.mask[None, :], jnp.asarray(_FILL_VALUE, jnp.bfloat16), x4)
    ), "case 4 mismatch vs reference"

    # Case 5: below the size threshold -> plain fused jnp.where fast path.
    y5 = jax.block_until_ready(mod(x))
    assert jnp.array_equal(y5, y_ref), "case 5 mismatch vs reference"

    print("KERNEL_OK")
</pallas_src>

<mosaic_0001>
module attributes {stable_mosaic.version = 11 : i64} {
  func.func @_masking_kernel(%arg0: i32, %arg1: memref<2x128xf32, #tpu.memory_space<vmem>>, %arg2: memref<1x128xf32, #tpu.memory_space<vmem>>, %arg3: memref<2x128xf32, #tpu.memory_space<vmem>>) attributes {dimension_semantics = [#tpu.dimension_semantics<parallel>], iteration_bounds = array<i64: 1>, scalar_prefetch = 0 : i64, scratch_operands = 0 : i64, tpu.core_type = #tpu.core_type<tc>, window_params = [{transform_indices = @transform_0, window_bounds = array<i64: 2, 128>}, {pipeline_mode = #tpu.pipeline_mode<synchronous>, transform_indices = @transform_1, window_bounds = array<i64: 1, 128>}, {transform_indices = @transform_2, window_bounds = array<i64: 2, 128>}]} {
    %c0 = arith.constant 0 : index
    %c0_0 = arith.constant 0 : index
    %0 = vector.load %arg2[%c0, %c0_0] : memref<1x128xf32, #tpu.memory_space<vmem>>, vector<1x128xf32>
    %cst = arith.constant 0.000000e+00 : f32
    %1 = vector.broadcast %cst : f32 to vector<1x128xf32>
    %2 = arith.cmpf one, %0, %1 : vector<1x128xf32>
    %c0_1 = arith.constant 0 : index
    %c0_2 = arith.constant 0 : index
    %3 = vector.load %arg1[%c0_1, %c0_2] : memref<2x128xf32, #tpu.memory_space<vmem>>, vector<2x128xf32>
    %cst_3 = arith.constant 9.99999997E-7 : f32
    %4 = vector.shape_cast %2 : vector<1x128xi1> to vector<1x128xi1>
    %5 = vector.broadcast %4 : vector<1x128xi1> to vector<2x128xi1>
    %6 = vector.broadcast %cst_3 : f32 to vector<2x128xf32>
    %7 = arith.select %5, %6, %3 : vector<2x128xi1>, vector<2x128xf32>
    %c0_4 = arith.constant 0 : index
    %c0_5 = arith.constant 0 : index
    %8 = vector.load %arg3[%c0_4, %c0_5] : memref<2x128xf32, #tpu.memory_space<vmem>>, vector<2x128xf32>
    tpu.vector_store %arg3[%c0_4, %c0_5], %7 {strides = array<i32>} : memref<2x128xf32, #tpu.memory_space<vmem>>, vector<2x128xf32>,
    return
  }
  func.func @transform_0(%arg0: i32) -> (i32, i32) {
    %c0_i32 = arith.constant 0 : i32
    %c0_i32_0 = arith.constant 0 : i32
    return %arg0, %c0_i32 : i32, i32
  }
  func.func @transform_1(%arg0: i32) -> (i32, i32) {
    %c0_i32 = arith.constant 0 : i32
    %c0_i32_0 = arith.constant 0 : i32
    %c0_i32_1 = arith.constant 0 : i32
    return %c0_i32, %c0_i32_0 : i32, i32
  }
  func.func @transform_2(%arg0: i32) -> (i32, i32) {
    %c0_i32 = arith.constant 0 : i32
    %c0_i32_0 = arith.constant 0 : i32
    return %arg0, %c0_i32 : i32, i32
  }
}

</mosaic_0001>

<llo_original>
// kernel: tpu_custom_call.1
$region0: #{tpu_custom_call.1}
  #allocation0 [shape = 'u32[]', space=smem, size = 0x4, offset = 0x4, fixed_abs, tag = 'smem constant byte address 0x4 - core index']
  #allocation1 [shape = 'u32[144,128]{1,0:T(1,128)}', space=vmem, size = 0x12000, scoped, tag = 'internal scratch']
  %s0 = inlined_call_operand.hbm [shape: f32[2,128], index: 0, kind: input, shape index: {}]
  %s1 = inlined_call_operand.vmem [shape: f32[1,128], index: 1, kind: input, shape index: {}]
  %s2 = inlined_call_operand.hbm [shape: f32[2,128], index: 2, kind: output, shape index: {}]
  %s3 = sld [smem:[#allocation0]]
  $region22: #{tpu_custom_call.1} parent=0
    _
  %s5 = ssub.s32 1, %s3
  %s6 = scalar_select 0, %s5, %s3
  $region1: #{tpu_custom_call.1} parent=0
    #allocation2 [shape = 'u8[1024]{0}', space=vmem, size = 0x400, scoped, tag = 'input window, operand 0, single buffered']
    #allocation3 [shape = 's32[1]{0}', space=sflag, size = 0x4, scoped, tag = 'scoped memory for tpu_custom_call.1']
    #allocation4 [shape = 's32[1]{0}', space=sflag, size = 0x4, scoped, tag = 'scoped memory for tpu_custom_call.1']
    #allocation5 [shape = 'u8[1024]{0}', space=vmem, size = 0x400, scoped, tag = 'output window, operand 0, single buffered']
    %7 = vsyncpa [#allocation3], 0
    %8 = vsyncpa [#allocation4], 0
    // Predicated region
    $region2: #{tpu_custom_call.1} parent=1 // pred_check
      _
    $region3: #{tpu_custom_call.1} parent=1 // pred_check_branch
      %10 = sbr.rel (0) target = $region5
    $region4: #{tpu_custom_call.1} parent=1 // pred_region
      %s12 = ssub.s32 32, 32
      %13 = vsyncadd [#allocation3], %s12
      %s15 = sshll.u32 [#allocation2], 4
      %s16 = int_to_ptr.vmem [resolvable:$true] %s15
      %18 = dma.hbm_to_vmem [thread:$0]  %s0, 32, %s16, [#allocation3]
    $region5: #{tpu_custom_call.1} parent=1 // pred_fallthru
      _
    // Predicated region
    $region6: #{tpu_custom_call.1} parent=1 // pred_check
      _
    $region7: #{tpu_custom_call.1} parent=1 // pred_check_branch
      %20 = sbr.rel (0) target = $region9
    $region8: #{tpu_custom_call.1} parent=1 // pred_region
      _
    $region9: #{tpu_custom_call.1} parent=1 // pred_fallthru
      _
    // Predicated region
    $region10: #{tpu_custom_call.1} parent=1 // pred_check
      _
    $region11: #{tpu_custom_call.1} parent=1 // pred_check_branch
      %22 = sbr.rel (0) target = $region13
    $region12: #{tpu_custom_call.1} parent=1 // pred_region
      %23 = dma.done [#allocation3], 32
    $region13: #{tpu_custom_call.1} parent=1 // pred_fallthru
      _
    %v24 = vld [vmem:[%s1] sm:$0x1]
    %vm25 = vcmp.ne.f32.partialorder %v24, 0.0
    %v26 = vld [vmem:[#allocation2] sm:$0x3]
    %v27 = vsel %vm25, 1, 0
    %v28 = vlaneseq
    %v29 = vshrl.u32 %v28, 7
    %v30 = vsub.s32 0, %v29
    %v31 = vrot.slane %v27, %v30
    %vm32 = vcmp.eq.s32.totalorder %v31, 1
    %v33 = vsel %vm32, 1e-06, %v26
    %34 = vst [vmem:[#allocation5] sm:$0x3] %v33
    // Predicated region
    $region14: #{tpu_custom_call.1} parent=1 // pred_check
      _
    $region15: #{tpu_custom_call.1} parent=1 // pred_check_branch
      %36 = sbr.rel (0) target = $region17
    $region16: #{tpu_custom_call.1} parent=1 // pred_region
      %s38 = ssub.s32 32, 32
      %39 = vsyncadd [#allocation4], %s38
      %s41 = sshll.u32 [#allocation5], 4
      %s42 = int_to_ptr.vmem [resolvable:$true] %s41
      %44 = dma.vmem_to_hbm [thread:$0]  %s42, 32, %s2, [#allocation4]
    $region17: #{tpu_custom_call.1} parent=1 // pred_fallthru
      _
    // Predicated region
    $region18: #{tpu_custom_call.1} parent=1 // pred_check
      _
    $region19: #{tpu_custom_call.1} parent=1 // pred_check_branch
      %46 = sbr.rel (0) target = $region21
    $region20: #{tpu_custom_call.1} parent=1 // pred_region
      %47 = dma.done [#allocation4], 32
    $region21: #{tpu_custom_call.1} parent=1 // pred_fallthru
      _
    %48 = vsyncpa [#allocation3], 1
    %49 = vsyncpa [#allocation4], 1

</llo_original>
